<compile_context>
chip_gen: v7x
topology: tpu7x:2x2x1
jax: 0.10.0
libtpu: 0.0.40
codegen_flags: <defaults>
</compile_context>

<pallas_src>
import functools

import jax
import jax.numpy as jnp
from jax import lax
from jax.experimental import pallas as pl
from jax.experimental.pallas import tpu as pltpu


# ----------------------------- Pallas kernel -------------------------------

def _basic_conv_fused_kernel(x_ref, b1_ref, b2_ref, bres_ref,
                             bias1_ref, biasr_ref, o_ref,
                             xpad_sc, h1pad_sc, *, mxu_dtype):
    """Fused BasicConv for one image tile.

    x_ref    : (1, H, W*Cin)    activation slab (lane dim = W*Cin)
    b1_ref   : (3, W*Cin, W*Cout)  banded conv1 weights (BN1 scale folded in)
    b2_ref   : (3, W*Cout, W*Cout) banded conv2 weights
    bres_ref : (W*Cin, W*Cout)     block-diag 1x1 residual weights (BNr scale folded)
    bias1/biasr_ref : (1, W*Cout)  per-channel biases tiled over W
    o_ref    : (1, H, W*Cout)      output slab (lane dim = 128 for Cout=8, W=16)
    xpad_sc  : (H+2, W*Cin)  f32 VMEM scratch (zero halo rows = H padding)
    h1pad_sc : (H+2, W*Cout) f32 VMEM scratch for the intermediate h1
    """
    H = x_ref.shape[1]
    WCin = x_ref.shape[2]
    WCout = o_ref.shape[2]
    f32 = jnp.float32

    # ---- stage x into an H-padded scratch (pad=1 handled in-kernel) -------
    x_slab = x_ref[0]                                   # (H, W*Cin)
    xpad_sc[0:1, :] = jnp.zeros((1, WCin), f32)
    xpad_sc[H + 1:H + 2, :] = jnp.zeros((1, WCin), f32)
    xpad_sc[1:H + 1, :] = x_slab

    # ---- conv1 (3x3, BN scale folded): 3 lane-dense matmuls ---------------
    acc1 = jnp.zeros((H, WCout), f32)
    for kh in range(3):                                 # static, unrolled
        lhs = xpad_sc[kh:kh + H, :].astype(mxu_dtype)
        acc1 = acc1 + jnp.dot(lhs, b1_ref[kh], preferred_element_type=f32)
    h1 = acc1 + bias1_ref[...]
    h1 = jnp.maximum(h1, 0.01 * h1)                     # LeakyReLU (slope 0.01)

    # ---- stage h1 on-chip (no HBM round trip between the two convs) -------
    h1pad_sc[0:1, :] = jnp.zeros((1, WCout), f32)
    h1pad_sc[H + 1:H + 2, :] = jnp.zeros((1, WCout), f32)
    h1pad_sc[1:H + 1, :] = h1

    # ---- residual 1x1 conv (BN scale folded) + bias -----------------------
    acc2 = jnp.dot(x_slab.astype(mxu_dtype), bres_ref[...],
                   preferred_element_type=f32)
    acc2 = acc2 + biasr_ref[...]

    # ---- conv2 (3x3) accumulated on top of the residual -------------------
    for kh in range(3):
        lhs = h1pad_sc[kh:kh + H, :].astype(mxu_dtype)
        acc2 = acc2 + jnp.dot(lhs, b2_ref[kh], preferred_element_type=f32)

    o_ref[0] = acc2.astype(o_ref.dtype)


# --------------------------- weight preparation ----------------------------

def _banded_conv3x3_weights(w_hwio, W, scale=None):
    """Banded weights B with B[kh][(j+kw-1)*Ci + c, j*Co + o] = w[kh,kw,c,o].

    The band structure also implements the W-direction zero padding (entries
    that would reference columns outside [0, W) are simply absent).
    Returns (3, W*Ci, W*Co) float32.
    """
    KH, KW, Ci, Co = w_hwio.shape
    wf = w_hwio.astype(jnp.float32)
    if scale is not None:
        wf = wf * scale.astype(jnp.float32)[None, None, None, :]
    j = jnp.arange(W)
    bands = []
    for kh in range(KH):
        frame = jnp.zeros((W + 2, Ci, W, Co), jnp.float32)
        for kw in range(KW):
            frame = frame.at[j + kw, :, j, :].add(wf[kh, kw])
        bands.append(frame[1:W + 1].reshape(W * Ci, W * Co))
    return jnp.stack(bands, axis=0)


def _blockdiag_conv1x1_weight(w_io, W, scale=None):
    """Block-diagonal weight: B[j*Ci + c, j*Co + o] = w[c, o] (* scale[o])."""
    Ci, Co = w_io.shape
    wf = w_io.astype(jnp.float32)
    if scale is not None:
        wf = wf * scale.astype(jnp.float32)[None, :]
    j = jnp.arange(W)
    B = jnp.zeros((W, Ci, W, Co), jnp.float32)
    B = B.at[j, :, j, :].add(wf)
    return B.reshape(W * Ci, W * Co)


def _fold_bn(gamma, beta, mean, var, eps):
    inv = gamma / jnp.sqrt(var + eps)
    return inv, beta - mean * inv


# ------------------------------- wrapper -----------------------------------

def basic_conv_forward(x_nchw, w1_oihw, w2_oihw, wres_oihw,
                       scale1, bias1, scale_r, bias_r,
                       *, mxu_dtype=jnp.bfloat16):
    """Forward pass of BasicConv.

    x_nchw: (N, Cin, H, W) f32.  Conv weights in PyTorch OIHW layout, bias-free.
    scale*/bias*: folded BatchNorm (eval mode) per-channel vectors, shape (Cout,).
    Returns (N, Cout, H, W) f32.
    """
    N, Cin, H, W = x_nchw.shape
    Cout = w1_oihw.shape[0]

    # NCHW -> NHWC -> per-image lane-dense 2-D slab (H, W*Cin); reshape is free.
    x_slab = jnp.transpose(x_nchw, (0, 2, 3, 1)).reshape(N, H, W * Cin)

    # OIHW -> HWIO
    w1 = jnp.transpose(w1_oihw, (2, 3, 1, 0))            # (3, 3, Cin,  Cout)
    w2 = jnp.transpose(w2_oihw, (2, 3, 1, 0))            # (3, 3, Cout, Cout)
    wr = jnp.transpose(wres_oihw, (2, 3, 1, 0))[0, 0]    # (Cin, Cout)

    # Fold BN scales into the conv weights; only bias-adds remain in-kernel.
    B1 = _banded_conv3x3_weights(w1, W, scale=scale1).astype(mxu_dtype)
    B2 = _banded_conv3x3_weights(w2, W, scale=None).astype(mxu_dtype)
    Br = _blockdiag_conv1x1_weight(wr, W, scale=scale_r).astype(mxu_dtype)
    bias1_slab = jnp.tile(bias1.astype(jnp.float32), W).reshape(1, W * Cout)
    biasr_slab = jnp.tile(bias_r.astype(jnp.float32), W).reshape(1, W * Cout)

    WCi, WCo = W * Cin, W * Cout
    kernel = functools.partial(_basic_conv_fused_kernel, mxu_dtype=mxu_dtype)

    out = pl.pallas_call(
        kernel,
        grid=(N,),                                        # batch tiling
        in_specs=[
            # per-image activation tile
            pl.BlockSpec((1, H, WCi), lambda n: (n, 0, 0)),
            # weights / biases: block 0 every step -> resident across the grid
            pl.BlockSpec((3, WCi, WCo), lambda n: (0, 0, 0)),
            pl.BlockSpec((3, WCo, WCo), lambda n: (0, 0, 0)),
            pl.BlockSpec((WCi, WCo), lambda n: (0, 0)),
            pl.BlockSpec((1, WCo), lambda n: (0, 0)),
            pl.BlockSpec((1, WCo), lambda n: (0, 0)),
        ],
        out_specs=pl.BlockSpec((1, H, WCo), lambda n: (n, 0, 0)),
        out_shape=jax.ShapeDtypeStruct((N, H, WCo), jnp.float32),
        scratch_shapes=[pltpu.VMEM((H + 2, WCi), jnp.float32),
                        pltpu.VMEM((H + 2, WCo), jnp.float32)],
        compiler_params=pltpu.CompilerParams(
            dimension_semantics=("parallel",),            # megacore / v7x 2-TC
            vmem_limit_bytes=32 * 1024 * 1024),           # well under v7x 64 MiB
    )(x_slab, B1, B2, Br, bias1_slab, biasr_slab)

    out = out.reshape(N, H, W, Cout)                      # free (same layout)
    return jnp.transpose(out, (0, 3, 1, 2))               # NHWC -> NCHW


# ------------------------------ reference ----------------------------------

def _ref_forward(x_nchw, w1_oihw, w2_oihw, wres_oihw,
                 scale1, bias1, scale_r, bias_r):
    dn = ('NCHW', 'OIHW', 'NCHW')
    prec = lax.Precision.HIGHEST
    c1 = lax.conv_general_dilated(x_nchw, w1_oihw, (1, 1), 'SAME',
                                  dimension_numbers=dn, precision=prec)
    h1 = c1 * scale1[None, :, None, None] + bias1[None, :, None, None]
    h1 = jnp.where(h1 >= 0, h1, 0.01 * h1)
    c2 = lax.conv_general_dilated(h1, w2_oihw, (1, 1), 'SAME',
                                  dimension_numbers=dn, precision=prec)
    r = lax.conv_general_dilated(x_nchw, wres_oihw, (1, 1), 'SAME',
                                 dimension_numbers=dn, precision=prec)
    r = r * scale_r[None, :, None, None] + bias_r[None, :, None, None]
    return c2 + r


# --------------------------------- main -------------------------------------

if __name__ == "__main__":
    N, Cin, Cout, H, W = 2, 4, 8, 16, 16
    eps = 1e-5

    keys = jax.random.split(jax.random.PRNGKey(0), 12)
    x = jax.random.normal(keys[0], (N, Cin, H, W), jnp.float32)

    # Conv weights in PyTorch layout (Cout, Cin, kh, kw), bias=False.
    w1 = jax.random.normal(keys[1], (Cout, Cin, 3, 3), jnp.float32) * 0.1
    w2 = jax.random.normal(keys[2], (Cout, Cout, 3, 3), jnp.float32) * 0.1
    wr = jax.random.normal(keys[3], (Cout, Cin, 1, 1), jnp.float32) * 0.1

    # BatchNorm parameters (eval mode).
    g1 = jax.random.uniform(keys[4], (Cout,), minval=0.5, maxval=1.5)
    b1 = jax.random.normal(keys[5], (Cout,)) * 0.1
    m1 = jax.random.normal(keys[6], (Cout,)) * 0.1
    v1 = jax.random.uniform(keys[7], (Cout,), minval=0.5, maxval=1.5)
    gr = jax.random.uniform(keys[8], (Cout,), minval=0.5, maxval=1.5)
    br = jax.random.normal(keys[9], (Cout,)) * 0.1
    mr = jax.random.normal(keys[10], (Cout,)) * 0.1
    vr = jax.random.uniform(keys[11], (Cout,), minval=0.5, maxval=1.5)

    scale1, bias1 = _fold_bn(g1, b1, m1, v1, eps)
    scale_r, bias_r = _fold_bn(gr, br, mr, vr, eps)

    ref = _ref_forward(x, w1, w2, wr, scale1, bias1, scale_r, bias_r)

    # Exact-structure check: f32 MXU operands.
    out_f32 = basic_conv_forward(x, w1, w2, wr, scale1, bias1, scale_r, bias_r,
                                 mxu_dtype=jnp.float32)
    out_f32 = jax.block_until_ready(out_f32)
    assert out_f32.shape == (N, Cout, H, W)
    assert jnp.allclose(out_f32, ref, atol=1e-4, rtol=1e-4)

    # Production config on v6e/v7x: bf16 MXU operands, f32 accumulation/epilogue.
    out_bf16 = basic_conv_forward(x, w1, w2, wr, scale1, bias1, scale_r, bias_r,
                                  mxu_dtype=jnp.bfloat16)
    out_bf16 = jax.block_until_ready(out_bf16)
    assert out_bf16.shape == (N, Cout, H, W)
    assert jnp.allclose(out_bf16, ref, atol=5e-2, rtol=5e-2)

    print("KERNEL_OK")
</pallas_src>

<mosaic_0001>
module attributes {stable_mosaic.version = 11 : i64} {
  func.func @_basic_conv_fused_kernel(%arg0: i32, %arg1: memref<1x16x64xf32, #tpu.memory_space<vmem>>, %arg2: memref<3x64x128xf32, #tpu.memory_space<vmem>>, %arg3: memref<3x128x128xf32, #tpu.memory_space<vmem>>, %arg4: memref<64x128xf32, #tpu.memory_space<vmem>>, %arg5: memref<1x128xf32, #tpu.memory_space<vmem>>, %arg6: memref<1x128xf32, #tpu.memory_space<vmem>>, %arg7: memref<1x16x128xf32, #tpu.memory_space<vmem>>, %arg8: memref<18x64xf32, #tpu.memory_space<vmem>>, %arg9: memref<18x128xf32, #tpu.memory_space<vmem>>) attributes {dimension_semantics = [#tpu.dimension_semantics<parallel>], iteration_bounds = array<i64: 2>, scalar_prefetch = 0 : i64, scratch_operands = 2 : i64, tpu.core_type = #tpu.core_type<tc>, window_params = [{transform_indices = @transform_0, window_bounds = array<i64: 1, 16, 64>}, {pipeline_mode = #tpu.pipeline_mode<synchronous>, transform_indices = @transform_1, window_bounds = array<i64: 3, 64, 128>}, {pipeline_mode = #tpu.pipeline_mode<synchronous>, transform_indices = @transform_2, window_bounds = array<i64: 3, 128, 128>}, {pipeline_mode = #tpu.pipeline_mode<synchronous>, transform_indices = @transform_3, window_bounds = array<i64: 64, 128>}, {pipeline_mode = #tpu.pipeline_mode<synchronous>, transform_indices = @transform_4, window_bounds = array<i64: 1, 128>}, {pipeline_mode = #tpu.pipeline_mode<synchronous>, transform_indices = @transform_5, window_bounds = array<i64: 1, 128>}, {transform_indices = @transform_6, window_bounds = array<i64: 1, 16, 128>}]} {
    %c0 = arith.constant 0 : index
    %c0_0 = arith.constant 0 : index
    %c0_1 = arith.constant 0 : index
    %0 = vector.load %arg1[%c0, %c0_0, %c0_1] : memref<1x16x64xf32, #tpu.memory_space<vmem>>, vector<1x16x64xf32>
    %1 = vector.shape_cast %0 : vector<1x16x64xf32> to vector<16x64xf32>
    %cst = arith.constant 0.000000e+00 : f32
    %2 = vector.broadcast %cst : f32 to vector<1x64xf32>
    %c0_2 = arith.constant 0 : index
    %c0_3 = arith.constant 0 : index
    %3 = vector.load %arg8[%c0_2, %c0_3] : memref<18x64xf32, #tpu.memory_space<vmem>>, vector<1x64xf32>
    tpu.vector_store %arg8[%c0_2, %c0_3], %2 {strides = array<i32>} : memref<18x64xf32, #tpu.memory_space<vmem>>, vector<1x64xf32>,
    %cst_4 = arith.constant 0.000000e+00 : f32
    %4 = vector.broadcast %cst_4 : f32 to vector<1x64xf32>
    %c17 = arith.constant 17 : index
    %c0_5 = arith.constant 0 : index
    %5 = vector.load %arg8[%c17, %c0_5] : memref<18x64xf32, #tpu.memory_space<vmem>>, vector<1x64xf32>
    tpu.vector_store %arg8[%c17, %c0_5], %4 {strides = array<i32>} : memref<18x64xf32, #tpu.memory_space<vmem>>, vector<1x64xf32>,
    %c1 = arith.constant 1 : index
    %c0_6 = arith.constant 0 : index
    %6 = vector.load %arg8[%c1, %c0_6] : memref<18x64xf32, #tpu.memory_space<vmem>>, vector<16x64xf32>
    tpu.vector_store %arg8[%c1, %c0_6], %1 {strides = array<i32>} : memref<18x64xf32, #tpu.memory_space<vmem>>, vector<16x64xf32>,
    %cst_7 = arith.constant 0.000000e+00 : f32
    %7 = vector.broadcast %cst_7 : f32 to vector<16x128xf32>
    %c0_8 = arith.constant 0 : index
    %c0_9 = arith.constant 0 : index
    %8 = vector.load %arg8[%c0_8, %c0_9] : memref<18x64xf32, #tpu.memory_space<vmem>>, vector<16x64xf32>
    %c0_10 = arith.constant 0 : index
    %c0_11 = arith.constant 0 : index
    %c0_12 = arith.constant 0 : index
    %9 = vector.load %arg2[%c0_10, %c0_11, %c0_12] : memref<3x64x128xf32, #tpu.memory_space<vmem>>, vector<1x64x128xf32>
    %10 = vector.shape_cast %9 : vector<1x64x128xf32> to vector<64x128xf32>
    %cst_13 = arith.constant dense<0.000000e+00> : vector<16x128xf32>
    %11 = tpu.matmul %8, %10, %cst_13 {dimension_numbers = #tpu.dot_dimension_numbers<[1], [0], [0], [1], [0, 0, 1, 1], [], []>} : vector<16x64xf32>, vector<64x128xf32>, vector<16x128xf32> -> vector<16x128xf32>
    %12 = arith.addf %7, %11 : vector<16x128xf32>
    %c1_14 = arith.constant 1 : index
    %c0_15 = arith.constant 0 : index
    %13 = vector.load %arg8[%c1_14, %c0_15] : memref<18x64xf32, #tpu.memory_space<vmem>>, vector<16x64xf32>
    %c1_16 = arith.constant 1 : index
    %c0_17 = arith.constant 0 : index
    %c0_18 = arith.constant 0 : index
    %14 = vector.load %arg2[%c1_16, %c0_17, %c0_18] : memref<3x64x128xf32, #tpu.memory_space<vmem>>, vector<1x64x128xf32>
    %15 = vector.shape_cast %14 : vector<1x64x128xf32> to vector<64x128xf32>
    %cst_19 = arith.constant dense<0.000000e+00> : vector<16x128xf32>
    %16 = tpu.matmul %13, %15, %cst_19 {dimension_numbers = #tpu.dot_dimension_numbers<[1], [0], [0], [1], [0, 0, 1, 1], [], []>} : vector<16x64xf32>, vector<64x128xf32>, vector<16x128xf32> -> vector<16x128xf32>
    %17 = arith.addf %12, %16 : vector<16x128xf32>
    %c2 = arith.constant 2 : index
    %c0_20 = arith.constant 0 : index
    %18 = vector.load %arg8[%c2, %c0_20] : memref<18x64xf32, #tpu.memory_space<vmem>>, vector<16x64xf32>
    %c2_21 = arith.constant 2 : index
    %c0_22 = arith.constant 0 : index
    %c0_23 = arith.constant 0 : index
    %19 = vector.load %arg2[%c2_21, %c0_22, %c0_23] : memref<3x64x128xf32, #tpu.memory_space<vmem>>, vector<1x64x128xf32>
    %20 = vector.shape_cast %19 : vector<1x64x128xf32> to vector<64x128xf32>
    %cst_24 = arith.constant dense<0.000000e+00> : vector<16x128xf32>
    %21 = tpu.matmul %18, %20, %cst_24 {dimension_numbers = #tpu.dot_dimension_numbers<[1], [0], [0], [1], [0, 0, 1, 1], [], []>} : vector<16x64xf32>, vector<64x128xf32>, vector<16x128xf32> -> vector<16x128xf32>
    %22 = arith.addf %17, %21 : vector<16x128xf32>
    %c0_25 = arith.constant 0 : index
    %c0_26 = arith.constant 0 : index
    %23 = vector.load %arg5[%c0_25, %c0_26] : memref<1x128xf32, #tpu.memory_space<vmem>>, vector<1x128xf32>
    %24 = vector.broadcast %23 : vector<1x128xf32> to vector<16x128xf32>
    %25 = arith.addf %22, %24 : vector<16x128xf32>
    %cst_27 = arith.constant 0.00999999977 : f32
    %26 = vector.broadcast %cst_27 : f32 to vector<16x128xf32>
    %27 = arith.mulf %26, %25 : vector<16x128xf32>
    %28 = arith.maximumf %25, %27 : vector<16x128xf32>
    %cst_28 = arith.constant 0.000000e+00 : f32
    %29 = vector.broadcast %cst_28 : f32 to vector<1x128xf32>
    %c0_29 = arith.constant 0 : index
    %c0_30 = arith.constant 0 : index
    %30 = vector.load %arg9[%c0_29, %c0_30] : memref<18x128xf32, #tpu.memory_space<vmem>>, vector<1x128xf32>
    tpu.vector_store %arg9[%c0_29, %c0_30], %29 {strides = array<i32>} : memref<18x128xf32, #tpu.memory_space<vmem>>, vector<1x128xf32>,
    %cst_31 = arith.constant 0.000000e+00 : f32
    %31 = vector.broadcast %cst_31 : f32 to vector<1x128xf32>
    %c17_32 = arith.constant 17 : index
    %c0_33 = arith.constant 0 : index
    %32 = vector.load %arg9[%c17_32, %c0_33] : memref<18x128xf32, #tpu.memory_space<vmem>>, vector<1x128xf32>
    tpu.vector_store %arg9[%c17_32, %c0_33], %31 {strides = array<i32>} : memref<18x128xf32, #tpu.memory_space<vmem>>, vector<1x128xf32>,
    %c1_34 = arith.constant 1 : index
    %c0_35 = arith.constant 0 : index
    %33 = vector.load %arg9[%c1_34, %c0_35] : memref<18x128xf32, #tpu.memory_space<vmem>>, vector<16x128xf32>
    tpu.vector_store %arg9[%c1_34, %c0_35], %28 {strides = array<i32>} : memref<18x128xf32, #tpu.memory_space<vmem>>, vector<16x128xf32>,
    %c0_36 = arith.constant 0 : index
    %c0_37 = arith.constant 0 : index
    %34 = vector.load %arg4[%c0_36, %c0_37] : memref<64x128xf32, #tpu.memory_space<vmem>>, vector<64x128xf32>
    %cst_38 = arith.constant dense<0.000000e+00> : vector<16x128xf32>
    %35 = tpu.matmul %1, %34, %cst_38 {dimension_numbers = #tpu.dot_dimension_numbers<[1], [0], [0], [1], [0, 0, 1, 1], [], []>} : vector<16x64xf32>, vector<64x128xf32>, vector<16x128xf32> -> vector<16x128xf32>
    %c0_39 = arith.constant 0 : index
    %c0_40 = arith.constant 0 : index
    %36 = vector.load %arg6[%c0_39, %c0_40] : memref<1x128xf32, #tpu.memory_space<vmem>>, vector<1x128xf32>
    %37 = vector.broadcast %36 : vector<1x128xf32> to vector<16x128xf32>
    %38 = arith.addf %35, %37 : vector<16x128xf32>
    %c0_41 = arith.constant 0 : index
    %c0_42 = arith.constant 0 : index
    %39 = vector.load %arg9[%c0_41, %c0_42] : memref<18x128xf32, #tpu.memory_space<vmem>>, vector<16x128xf32>
    %c0_43 = arith.constant 0 : index
    %c0_44 = arith.constant 0 : index
    %c0_45 = arith.constant 0 : index
    %40 = vector.load %arg3[%c0_43, %c0_44, %c0_45] : memref<3x128x128xf32, #tpu.memory_space<vmem>>, vector<1x128x128xf32>
    %41 = vector.shape_cast %40 : vector<1x128x128xf32> to vector<128x128xf32>
    %cst_46 = arith.constant dense<0.000000e+00> : vector<16x128xf32>
    %42 = tpu.matmul %39, %41, %cst_46 {dimension_numbers = #tpu.dot_dimension_numbers<[1], [0], [0], [1], [0, 0, 1, 1], [], []>} : vector<16x128xf32>, vector<128x128xf32>, vector<16x128xf32> -> vector<16x128xf32>
    %43 = arith.addf %38, %42 : vector<16x128xf32>
    %c1_47 = arith.constant 1 : index
    %c0_48 = arith.constant 0 : index
    %44 = vector.load %arg9[%c1_47, %c0_48] : memref<18x128xf32, #tpu.memory_space<vmem>>, vector<16x128xf32>
    %c1_49 = arith.constant 1 : index
    %c0_50 = arith.constant 0 : index
    %c0_51 = arith.constant 0 : index
    %45 = vector.load %arg3[%c1_49, %c0_50, %c0_51] : memref<3x128x128xf32, #tpu.memory_space<vmem>>, vector<1x128x128xf32>
    %46 = vector.shape_cast %45 : vector<1x128x128xf32> to vector<128x128xf32>
    %cst_52 = arith.constant dense<0.000000e+00> : vector<16x128xf32>
    %47 = tpu.matmul %44, %46, %cst_52 {dimension_numbers = #tpu.dot_dimension_numbers<[1], [0], [0], [1], [0, 0, 1, 1], [], []>} : vector<16x128xf32>, vector<128x128xf32>, vector<16x128xf32> -> vector<16x128xf32>
    %48 = arith.addf %43, %47 : vector<16x128xf32>
    %c2_53 = arith.constant 2 : index
    %c0_54 = arith.constant 0 : index
    %49 = vector.load %arg9[%c2_53, %c0_54] : memref<18x128xf32, #tpu.memory_space<vmem>>, vector<16x128xf32>
    %c2_55 = arith.constant 2 : index
    %c0_56 = arith.constant 0 : index
    %c0_57 = arith.constant 0 : index
    %50 = vector.load %arg3[%c2_55, %c0_56, %c0_57] : memref<3x128x128xf32, #tpu.memory_space<vmem>>, vector<1x128x128xf32>
    %51 = vector.shape_cast %50 : vector<1x128x128xf32> to vector<128x128xf32>
    %cst_58 = arith.constant dense<0.000000e+00> : vector<16x128xf32>
    %52 = tpu.matmul %49, %51, %cst_58 {dimension_numbers = #tpu.dot_dimension_numbers<[1], [0], [0], [1], [0, 0, 1, 1], [], []>} : vector<16x128xf32>, vector<128x128xf32>, vector<16x128xf32> -> vector<16x128xf32>
    %53 = arith.addf %48, %52 : vector<16x128xf32>
    %c0_59 = arith.constant 0 : index
    %c0_60 = arith.constant 0 : index
    %c0_61 = arith.constant 0 : index
    %54 = vector.load %arg7[%c0_59, %c0_60, %c0_61] : memref<1x16x128xf32, #tpu.memory_space<vmem>>, vector<1x16x128xf32>
    %55 = vector.shape_cast %54 : vector<1x16x128xf32> to vector<16x128xf32>
    %56 = vector.shape_cast %53 : vector<16x128xf32> to vector<1x16x128xf32>
    tpu.vector_store %arg7[%c0_59, %c0_60, %c0_61], %56 {strides = array<i32>} : memref<1x16x128xf32, #tpu.memory_space<vmem>>, vector<1x16x128xf32>,
    return
  }
  func.func @transform_0(%arg0: i32) -> (i32, i32, i32) {
    %c0_i32 = arith.constant 0 : i32
    %c0_i32_0 = arith.constant 0 : i32
    %c0_i32_1 = arith.constant 0 : i32
    return %arg0, %c0_i32, %c0_i32_0 : i32, i32, i32
  }
  func.func @transform_1(%arg0: i32) -> (i32, i32, i32) {
    %c0_i32 = arith.constant 0 : i32
    %c0_i32_0 = arith.constant 0 : i32
    %c0_i32_1 = arith.constant 0 : i32
    %c0_i32_2 = arith.constant 0 : i32
    return %c0_i32, %c0_i32_0, %c0_i32_1 : i32, i32, i32
  }
  func.func @transform_2(%arg0: i32) -> (i32, i32, i32) {
    %c0_i32 = arith.constant 0 : i32
    %c0_i32_0 = arith.constant 0 : i32
    %c0_i32_1 = arith.constant 0 : i32
    %c0_i32_2 = arith.constant 0 : i32
    return %c0_i32, %c0_i32_0, %c0_i32_1 : i32, i32, i32
  }
  func.func @transform_3(%arg0: i32) -> (i32, i32) {
    %c0_i32 = arith.constant 0 : i32
    %c0_i32_0 = arith.constant 0 : i32
    %c0_i32_1 = arith.constant 0 : i32
    return %c0_i32, %c0_i32_0 : i32, i32
  }
  func.func @transform_4(%arg0: i32) -> (i32, i32) {
    %c0_i32 = arith.constant 0 : i32
    %c0_i32_0 = arith.constant 0 : i32
    %c0_i32_1 = arith.constant 0 : i32
    return %c0_i32, %c0_i32_0 : i32, i32
  }
  func.func @transform_5(%arg0: i32) -> (i32, i32) {
    %c0_i32 = arith.constant 0 : i32
    %c0_i32_0 = arith.constant 0 : i32
    %c0_i32_1 = arith.constant 0 : i32
    return %c0_i32, %c0_i32_0 : i32, i32
  }
  func.func @transform_6(%arg0: i32) -> (i32, i32, i32) {
    %c0_i32 = arith.constant 0 : i32
    %c0_i32_0 = arith.constant 0 : i32
    %c0_i32_1 = arith.constant 0 : i32
    return %arg0, %c0_i32, %c0_i32_0 : i32, i32, i32
  }
}

</mosaic_0001>

<llo_original>
// kernel: tpu_custom_call.1
$region0: #{tpu_custom_call.1}
  #allocation0 [shape = 'u32[]', space=smem, size = 0x4, offset = 0x4, fixed_abs, tag = 'smem constant byte address 0x4 - core index']
  #allocation1 [shape = 'u32[144,128]{1,0:T(1,128)}', space=vmem, size = 0x12000, scoped, tag = 'internal scratch']
  #allocation2 [shape = 'f32[18,64]{1,0:T(8,128)}', space=vmem, size = 0x3000, scoped, tag = 'scratch operand']
  #allocation3 [shape = 'f32[18,128]{1,0:T(8,128)}', space=vmem, size = 0x3000, scoped, tag = 'scratch operand']
  %s0 = inlined_call_operand.hbm [shape: f32[2,16,64], index: 0, kind: input, shape index: {}]
  %s1 = inlined_call_operand.hbm [shape: f32[3,64,128], index: 1, kind: input, shape index: {}]
  %s2 = inlined_call_operand.hbm [shape: f32[3,128,128], index: 2, kind: input, shape index: {}]
  %s3 = inlined_call_operand.hbm [shape: f32[64,128], index: 3, kind: input, shape index: {}]
  %s4 = inlined_call_operand.vmem [shape: f32[1,128], index: 4, kind: input, shape index: {}]
  %s5 = inlined_call_operand.vmem [shape: f32[1,128], index: 5, kind: input, shape index: {}]
  %s6 = inlined_call_operand.hbm [shape: f32[2,16,128], index: 6, kind: output, shape index: {}]
  %s7 = sld [smem:[#allocation0]]
  $region73: #{tpu_custom_call.1} parent=0
    _
  %s9 = ssub.s32 1, %s7
  %s10 = scalar_select 0, %s9, %s7
  $region1: #{tpu_custom_call.1} parent=0
    #allocation4 [shape = 'u8[16384]{0}', space=vmem, size = 0x4000, scoped, tag = 'input window, operand 0']
    #allocation5 [shape = 's32[2]{0}', space=sflag, size = 0x8, scoped, tag = 'scoped memory for tpu_custom_call.1']
    #allocation6 [shape = 's32[2]{0}', space=sflag, size = 0x8, scoped, tag = 'scoped memory for tpu_custom_call.1']
    #allocation7 [shape = 'u8[98304]{0}', space=vmem, size = 0x18000, scoped, tag = 'input window, operand 1, single buffered']
    #allocation8 [shape = 's32[1]{0}', space=sflag, size = 0x4, scoped, tag = 'scoped memory for tpu_custom_call.1']
    #allocation9 [shape = 'u8[196608]{0}', space=vmem, size = 0x30000, scoped, tag = 'input window, operand 2, single buffered']
    #allocation10 [shape = 'u8[32768]{0}', space=vmem, size = 0x8000, scoped, tag = 'input window, operand 3, single buffered']
    #allocation11 [shape = 's32[1]{0}', space=sflag, size = 0x4, scoped, tag = 'scoped memory for tpu_custom_call.1']
    #allocation12 [shape = 'u8[16384]{0}', space=vmem, size = 0x4000, scoped, tag = 'output window, operand 0']
    %11 = vsyncpa [#allocation5], 0
    %s12 = scalar_lea.sflag [#allocation5], 1
    %13 = vsyncpa %s12, 0
    %14 = vsyncpa [#allocation8], 0
    %15 = vsyncpa [#allocation11], 0
    %16 = vsyncpa [#allocation6], 0
    %s17 = scalar_lea.sflag [#allocation6], 1
    %18 = vsyncpa %s17, 0
    loop: start=0, step=1, limit=4
    $region2: #{tpu_custom_call.1} parent=1 // loop_pre_header
      _
    $region3: #{tpu_custom_call.1} parent=1 // loop_header
      %s20 = sphi 0, %s24
      %p21 = scmp.ge.s32.totalorder %s20, 4
      %s30 = sphi 0, %s32
      %s33 = sphi 0, %s30
      %s34 = sphi 0, %s33
      %s50 = sphi 0, %s34
      %s54 = sphi 0, %s54
      %s56 = sphi 0, %s54
      %s57 = sphi 0, %s56
      %s71 = sphi 0, %s57
      %s75 = sphi 0, %s75
      %s77 = sphi 0, %s75
      %s78 = sphi 0, %s77
      %s92 = sphi 0, %s78
      %s96 = sphi 0, %s96
      %s98 = sphi 0, %s96
      %s99 = sphi 0, %s98
      %s113 = sphi 0, %s99
      %s117 = sphi 0, %s117
      %s119 = sphi 0, %s117
      %s120 = sphi 0, %s119
      %s134 = sphi 0, %s120
      %s138 = sphi 0, %s138
      %s140 = sphi 0, %s138
      %s141 = sphi 0, %s140
      %s155 = sphi 0, %s141
      %s161 = sphi 0, %s163
      %s164 = sphi 0, %s161
      %s165 = sphi 0, %s164
      %s181 = sphi 0, %s165
    $region4: #{tpu_custom_call.1} parent=1 // loop_header_branch
      %23 = sbr.rel (%p21) target = $region8
    $region5: #{tpu_custom_call.1} parent=1 // loop_body
      %s25 = ssub.s32 %s20, 1
      %s26 = ssub.s32 %s20, 2
      %s27 = sadd.s32 %s20, 1
      %s28 = ssub.s32 %s20, %s27
      %p29 = scmp.eq.s32.totalorder %s28, 0
      %s31 = sadd.s32 %s30, 1
      %s32 = scalar_select %p29, %s30, %s31
      %p35 = pneg %p29
      %p36 = scmp.eq.s32.totalorder %s20, 1
      %p37 = por %p35, %p36
      %p38 = scmp.ne.s32.totalorder %s30, %s33
      %p39 = scmp.eq.s32.totalorder %s20, 0
      %p40 = por %p38, %p39
      %p41 = scmp.ne.s32.totalorder %s30, %s33
      %p42 = scmp.eq.s32.totalorder %s25, 1
      %p43 = por %p41, %p42
      %p44 = scmp.ne.s32.totalorder %s33, %s34
      %p45 = scmp.eq.s32.totalorder %s25, 0
      %p46 = por %p44, %p45
      %p47 = scmp.ne.s32.totalorder %s33, %s34
      %p48 = scmp.eq.s32.totalorder %s26, 1
      %p49 = por %p47, %p48
      %p51 = scmp.ne.s32.totalorder %s34, %s50
      %p52 = scmp.eq.s32.totalorder %s26, 0
      %p53 = por %p51, %p52
      %s55 = sadd.s32 %s54, 1
      %p58 = scmp.eq.s32.totalorder %s20, 1
      %p59 = scmp.ne.s32.totalorder %s54, %s56
      %p60 = scmp.eq.s32.totalorder %s20, 0
      %p61 = por %p59, %p60
      %p62 = scmp.ne.s32.totalorder %s54, %s56
      %p63 = scmp.eq.s32.totalorder %s25, 1
      %p64 = por %p62, %p63
      %p65 = scmp.ne.s32.totalorder %s56, %s57
      %p66 = scmp.eq.s32.totalorder %s25, 0
      %p67 = por %p65, %p66
      %p68 = scmp.ne.s32.totalorder %s56, %s57
      %p69 = scmp.eq.s32.totalorder %s26, 1
      %p70 = por %p68, %p69
      %p72 = scmp.ne.s32.totalorder %s57, %s71
      %p73 = scmp.eq.s32.totalorder %s26, 0
      %p74 = por %p72, %p73
      %s76 = sadd.s32 %s75, 1
      %p79 = scmp.eq.s32.totalorder %s20, 1
      %p80 = scmp.ne.s32.totalorder %s75, %s77
      %p81 = scmp.eq.s32.totalorder %s20, 0
      %p82 = por %p80, %p81
      %p83 = scmp.ne.s32.totalorder %s75, %s77
      %p84 = scmp.eq.s32.totalorder %s25, 1
      %p85 = por %p83, %p84
      %p86 = scmp.ne.s32.totalorder %s77, %s78
      %p87 = scmp.eq.s32.totalorder %s25, 0
      %p88 = por %p86, %p87
      %p89 = scmp.ne.s32.totalorder %s77, %s78
      %p90 = scmp.eq.s32.totalorder %s26, 1
      %p91 = por %p89, %p90
      %p93 = scmp.ne.s32.totalorder %s78, %s92
      %p94 = scmp.eq.s32.totalorder %s26, 0
      %p95 = por %p93, %p94
      %s97 = sadd.s32 %s96, 1
      %p100 = scmp.eq.s32.totalorder %s20, 1
      %p101 = scmp.ne.s32.totalorder %s96, %s98
      %p102 = scmp.eq.s32.totalorder %s20, 0
      %p103 = por %p101, %p102
      %p104 = scmp.ne.s32.totalorder %s96, %s98
      %p105 = scmp.eq.s32.totalorder %s25, 1
      %p106 = por %p104, %p105
      %p107 = scmp.ne.s32.totalorder %s98, %s99
      %p108 = scmp.eq.s32.totalorder %s25, 0
      %p109 = por %p107, %p108
      %p110 = scmp.ne.s32.totalorder %s98, %s99
      %p111 = scmp.eq.s32.totalorder %s26, 1
      %p112 = por %p110, %p111
      %p114 = scmp.ne.s32.totalorder %s99, %s113
      %p115 = scmp.eq.s32.totalorder %s26, 0
      %p116 = por %p114, %p115
      %s118 = sadd.s32 %s117, 1
      %p121 = scmp.eq.s32.totalorder %s20, 1
      %p122 = scmp.ne.s32.totalorder %s117, %s119
      %p123 = scmp.eq.s32.totalorder %s20, 0
      %p124 = por %p122, %p123
      %p125 = scmp.ne.s32.totalorder %s117, %s119
      %p126 = scmp.eq.s32.totalorder %s25, 1
      %p127 = por %p125, %p126
      %p128 = scmp.ne.s32.totalorder %s119, %s120
      %p129 = scmp.eq.s32.totalorder %s25, 0
      %p130 = por %p128, %p129
      %p131 = scmp.ne.s32.totalorder %s119, %s120
      %p132 = scmp.eq.s32.totalorder %s26, 1
      %p133 = por %p131, %p132
      %p135 = scmp.ne.s32.totalorder %s120, %s134
      %p136 = scmp.eq.s32.totalorder %s26, 0
      %p137 = por %p135, %p136
      %s139 = sadd.s32 %s138, 1
      %p142 = scmp.eq.s32.totalorder %s20, 1
      %p143 = scmp.ne.s32.totalorder %s138, %s140
      %p144 = scmp.eq.s32.totalorder %s20, 0
      %p145 = por %p143, %p144
      %p146 = scmp.ne.s32.totalorder %s138, %s140
      %p147 = scmp.eq.s32.totalorder %s25, 1
      %p148 = por %p146, %p147
      %p149 = scmp.ne.s32.totalorder %s140, %s141
      %p150 = scmp.eq.s32.totalorder %s25, 0
      %p151 = por %p149, %p150
      %p152 = scmp.ne.s32.totalorder %s140, %s141
      %p153 = scmp.eq.s32.totalorder %s26, 1
      %p154 = por %p152, %p153
      %p156 = scmp.ne.s32.totalorder %s141, %s155
      %p157 = scmp.eq.s32.totalorder %s26, 0
      %p158 = por %p156, %p157
      %s159 = ssub.s32 %s20, %s27
      %p160 = scmp.eq.s32.totalorder %s159, 0
      %s162 = sadd.s32 %s161, 1
      %s163 = scalar_select %p160, %s161, %s162
      %p166 = pneg %p160
      %p167 = scmp.eq.s32.totalorder %s20, 1
      %p168 = por %p166, %p167
      %p169 = scmp.ne.s32.totalorder %s161, %s164
      %p170 = scmp.eq.s32.totalorder %s20, 0
      %p171 = por %p169, %p170
      %p172 = scmp.ne.s32.totalorder %s161, %s164
      %p173 = scmp.eq.s32.totalorder %s25, 1
      %p174 = por %p172, %p173
      %p175 = scmp.ne.s32.totalorder %s164, %s165
      %p176 = scmp.eq.s32.totalorder %s25, 0
      %p177 = por %p175, %p176
      %p178 = scmp.ne.s32.totalorder %s164, %s165
      %p179 = scmp.eq.s32.totalorder %s26, 1
      %p180 = por %p178, %p179
      %p182 = scmp.ne.s32.totalorder %s165, %s181
      %p183 = scmp.eq.s32.totalorder %s26, 0
      %p184 = por %p182, %p183
      %p185 = scmp.le.s32.totalorder 1, %s20
      %p186 = scmp.lt.s32.totalorder %s20, 3
      %p187 = pnand %p185, %p186
      %p188 = pneg %p187
      // Predicated region
      $region9: #{tpu_custom_call.1} parent=5 // pred_check
        _
      $region10: #{tpu_custom_call.1} parent=5 // pred_check_branch
        %190 = sbr.rel (%p187) target = $region12
      $region11: #{tpu_custom_call.1} parent=5 // pred_region
        %s191 = ssub.s32 %s20, 1
        // Predicated region
        $region13: #{tpu_custom_call.1} parent=11 // pred_check
          %p192 = pneg %p67
        $region14: #{tpu_custom_call.1} parent=11 // pred_check_branch
          %194 = sbr.rel (%p192) target = $region16
        $region15: #{tpu_custom_call.1} parent=11 // pred_region
          %s196 = ssub.s32 3072, 3072
          %197 = vsyncadd [#allocation8], %s196
          %s198 = sshll.u32 [#allocation7], 4
          %s199 = int_to_ptr.vmem [resolvable:$true] %s198
          %204 = dma.hbm_to_vmem [thread:$0]  %s1, 3072, %s199, [#allocation8], 128, 128, 8
        $region16: #{tpu_custom_call.1} parent=11 // pred_fallthru
          _
        // Predicated region
        $region17: #{tpu_custom_call.1} parent=11 // pred_check
          %p205 = pneg %p88
        $region18: #{tpu_custom_call.1} parent=11 // pred_check_branch
          %207 = sbr.rel (%p205) target = $region20
        $region19: #{tpu_custom_call.1} parent=11 // pred_region
          %s209 = ssub.s32 6144, 6144
          %210 = vsyncadd [#allocation8], %s209
          %s211 = sshll.u32 [#allocation9], 4
          %s212 = int_to_ptr.vmem [resolvable:$true] %s211
          %217 = dma.hbm_to_vmem [thread:$0]  %s2, 6144, %s212, [#allocation8], 128, 128, 8
        $region20: #{tpu_custom_call.1} parent=11 // pred_fallthru
          _
        // Predicated region
        $region21: #{tpu_custom_call.1} parent=11 // pred_check
          %p218 = pneg %p109
        $region22: #{tpu_custom_call.1} parent=11 // pred_check_branch
          %220 = sbr.rel (%p218) target = $region24
        $region23: #{tpu_custom_call.1} parent=11 // pred_region
          %s222 = ssub.s32 1024, 1024
          %223 = vsyncadd [#allocation11], %s222
          %s224 = sshll.u32 [#allocation10], 4
          %s225 = int_to_ptr.vmem [resolvable:$true] %s224
          %230 = dma.hbm_to_vmem [thread:$0]  %s3, 1024, %s225, [#allocation11], 128, 128, 8
        $region24: #{tpu_custom_call.1} parent=11 // pred_fallthru
          _
        // Predicated region
        $region25: #{tpu_custom_call.1} parent=11 // pred_check
          %p231 = pneg %p130
        $region26: #{tpu_custom_call.1} parent=11 // pred_check_branch
          %233 = sbr.rel (%p231) target = $region28
        $region27: #{tpu_custom_call.1} parent=11 // pred_region
          _
        $region28: #{tpu_custom_call.1} parent=11 // pred_fallthru
          _
        // Predicated region
        $region29: #{tpu_custom_call.1} parent=11 // pred_check
          %p234 = pneg %p151
        $region30: #{tpu_custom_call.1} parent=11 // pred_check_branch
          %236 = sbr.rel (%p234) target = $region32
        $region31: #{tpu_custom_call.1} parent=11 // pred_region
          _
        $region32: #{tpu_custom_call.1} parent=11 // pred_fallthru
          _
      $region12: #{tpu_custom_call.1} parent=5 // pred_fallthru
        _
      %p237 = scmp.lt.s32.totalorder %s20, 2
      // Predicated region
      $region33: #{tpu_custom_call.1} parent=5 // pred_check
        %p238 = pneg %p237
      $region34: #{tpu_custom_call.1} parent=5 // pred_check_branch
        %240 = sbr.rel (%p238) target = $region36
      $region35: #{tpu_custom_call.1} parent=5 // pred_region
        // Predicated region
        $region37: #{tpu_custom_call.1} parent=35 // pred_check
          %p241 = pneg %p40
        $region38: #{tpu_custom_call.1} parent=35 // pred_check_branch
          %243 = sbr.rel (%p241) target = $region40
        $region39: #{tpu_custom_call.1} parent=35 // pred_region
          %s244 = sand.u32 %s30, 1
          %s245 = scalar_lea.sflag [#allocation5], %s244
          %s246 = sand.u32 %s30, 1
          %s247 = smul.addr %s246, 16
          %s248 = scalar_lea.vmem [#allocation4], %s247
          %s250 = ssub.s32 256, 256
          %251 = vsyncadd %s245, %s250
          %s252 = smul.addr %s20, 2
          %s253 = smul.addr %s252, 128
          %s254 = scalar_lea.hbm %s0, %s253
          %s255 = sshll.u32 %s248, 4
          %s256 = int_to_ptr.vmem [resolvable:$true] %s255
          %261 = dma.hbm_to_vmem [thread:$0]  %s254, 256, %s256, %s245, 128, 128, 8
        $region40: #{tpu_custom_call.1} parent=35 // pred_fallthru
          _
      $region36: #{tpu_custom_call.1} parent=5 // pred_fallthru
        _
      %p262 = scmp.le.s32.totalorder 1, %s20
      %p263 = scmp.lt.s32.totalorder %s20, 3
      %p264 = pnand %p262, %p263
      %p265 = pneg %p264
      // Predicated region
      $region41: #{tpu_custom_call.1} parent=5 // pred_check
        _
      $region42: #{tpu_custom_call.1} parent=5 // pred_check_branch
        %267 = sbr.rel (%p264) target = $region44
      $region43: #{tpu_custom_call.1} parent=5 // pred_region
        %s268 = ssub.s32 %s20, 1
        %s269 = sand.u32 %s33, 1
        %s270 = scalar_lea.sflag [#allocation5], %s269
        %s271 = sand.u32 %s33, 1
        %s272 = smul.addr %s271, 16
        %s273 = scalar_lea.vmem [#allocation4], %s272
        // Predicated region
        $region45: #{tpu_custom_call.1} parent=43 // pred_check
          %p274 = pneg %p46
        $region46: #{tpu_custom_call.1} parent=43 // pred_check_branch
          %276 = sbr.rel (%p274) target = $region48
        $region47: #{tpu_custom_call.1} parent=43 // pred_region
          %277 = dma.done %s270, 256
        $region48: #{tpu_custom_call.1} parent=43 // pred_fallthru
          _
        // Predicated region
        $region49: #{tpu_custom_call.1} parent=43 // pred_check
          %p278 = pneg %p67
        $region50: #{tpu_custom_call.1} parent=43 // pred_check_branch
          %280 = sbr.rel (%p278) target = $region52
        $region51: #{tpu_custom_call.1} parent=43 // pred_region
          %281 = dma.done [#allocation8], 3072
        $region52: #{tpu_custom_call.1} parent=43 // pred_fallthru
          _
        // Predicated region
        $region53: #{tpu_custom_call.1} parent=43 // pred_check
          %p282 = pneg %p88
        $region54: #{tpu_custom_call.1} parent=43 // pred_check_branch
          %284 = sbr.rel (%p282) target = $region56
        $region55: #{tpu_custom_call.1} parent=43 // pred_region
          %285 = dma.done [#allocation8], 6144
        $region56: #{tpu_custom_call.1} parent=43 // pred_fallthru
          _
        // Predicated region
        $region57: #{tpu_custom_call.1} parent=43 // pred_check
          %p286 = pneg %p109
        $region58: #{tpu_custom_call.1} parent=43 // pred_check_branch
          %288 = sbr.rel (%p286) target = $region60
        $region59: #{tpu_custom_call.1} parent=43 // pred_region
          %289 = dma.done [#allocation11], 1024
        $region60: #{tpu_custom_call.1} parent=43 // pred_fallthru
          _
        %s290 = sand.u32 %s33, 1
        %s291 = scalar_lea.sflag [#allocation5], %s290
        %s292 = sand.u32 %s33, 1
        %s293 = smul.addr %s292, 16
        %s294 = scalar_lea.vmem [#allocation4], %s293
        %p295 = pneg %p46
        %p296 = pneg %p43
        %p297 = pneg %p67
        %p298 = pneg %p64
        %p299 = pneg %p88
        %p300 = pneg %p85
        %p301 = pneg %p109
        %p302 = pneg %p106
        %p303 = pneg %p130
        %p304 = pneg %p127
        %p305 = pneg %p151
        %p306 = pneg %p148
        %p307 = pneg %p177
        %p308 = pneg %p174
        %s309 = sand.u32 %s164, 1
        %s310 = scalar_lea.sflag [#allocation6], %s309
        %s311 = sand.u32 %s164, 1
        %s312 = smul.addr %s311, 16
        %s313 = scalar_lea.vmem [#allocation12], %s312
        %v314 = vld [vmem:[%s273] sm:$0xff]
        %v315 = vld [vmem:[%s273 + $0x8] sm:$0xff]
        %vm316 = vcmask 516096
        %317 = vst.msk [vmem:[#allocation2] sm:$0x1] %vm316, 0.0
        %318 = vst.msk [vmem:[#allocation2 + $0x11] sm:$0x1] %vm316, 0.0
        %vm319 = vcmask 523264
        %320 = vst.msk [vmem:[#allocation2 + $0x1] sm:$0xff] %vm319, %v314
        %321 = vst.msk [vmem:[#allocation2 + $0x9] sm:$0xff] %vm319, %v315
        %v322 = vld [vmem:[#allocation2] sm:$0xff]
        %v323 = vld [vmem:[#allocation2 + $0x8] sm:$0xff]
        %v324 = vld [vmem:[#allocation7] sm:$0xff]
        %v325 = vld [vmem:[#allocation7 + $0x8] sm:$0xff]
        %v326 = vld [vmem:[#allocation7 + $0x10] sm:$0xff]
        %v327 = vld [vmem:[#allocation7 + $0x18] sm:$0xff]
        %v328 = vld [vmem:[#allocation7 + $0x20] sm:$0xff]
        %v329 = vld [vmem:[#allocation7 + $0x28] sm:$0xff]
        %v330 = vld [vmem:[#allocation7 + $0x30] sm:$0xff]
        %v331 = vld [vmem:[#allocation7 + $0x38] sm:$0xff]
        %v332 = vld [vmem:[#allocation2 + $0x1] sm:$0xff]
        %v333 = vld [vmem:[#allocation2 + $0x9] sm:$0xff]
        %s334 = scalar_lea.vmem [#allocation7], 64
        %v335 = vld [vmem:[%s334] sm:$0xff]
        %v336 = vld [vmem:[%s334 + $0x8] sm:$0xff]
        %v337 = vld [vmem:[%s334 + $0x10] sm:$0xff]
        %v338 = vld [vmem:[%s334 + $0x18] sm:$0xff]
        %v339 = vld [vmem:[%s334 + $0x20] sm:$0xff]
        %v340 = vld [vmem:[%s334 + $0x28] sm:$0xff]
        %v341 = vld [vmem:[%s334 + $0x30] sm:$0xff]
        %v342 = vld [vmem:[%s334 + $0x38] sm:$0xff]
        %v344 = vsel %vm319, %v332, 0
        %v347 = vsel %vm319, %v333, 0
        %349 = vmatprep.subr.mxu0 0.0
        %350 = vmatpush1.msra.mxu0 %v335
        %351 = vmatprep.subr.mxu0 0.0
        %352 = vmatpush1.msra.mxu0 %v336
        %353 = vmatprep.subr.mxu0 0.0
        %354 = vmatpush1.msra.mxu0 %v337
        %355 = vmatprep.subr.mxu0 0.0
        %356 = vmatpush1.msra.mxu0 %v338
        %357 = vmatprep.subr.mxu0 0.0
        %358 = vmatpush1.msra.mxu0 %v339
        %359 = vmatprep.subr.mxu0 0.0
        %360 = vmatpush1.msra.mxu0 %v340
        %361 = vmatprep.subr.mxu0 0.0
        %362 = vmatpush1.msra.mxu0 %v341
        %363 = vmatprep.subr.mxu0 0.0
        %364 = vmatpush1.msra.mxu0 %v342
        %365 = vmatprep.subr.mxu0 0.0
        %366 = vmatpush1.msra.mxu0 0.0
        %367 = vmatprep.subr.mxu0 0.0
        %368 = vmatpush1.msra.mxu0 0.0
        %369 = vmatprep.subr.mxu0 0.0
        %370 = vmatpush1.msra.mxu0 0.0
        %371 = vmatprep.subr.mxu0 0.0
        %372 = vmatpush1.msra.mxu0 0.0
        %373 = vmatprep.subr.mxu0 0.0
        %374 = vmatpush1.msra.mxu0 0.0
        %375 = vmatprep.subr.mxu0 0.0
        %376 = vmatpush1.msra.mxu0 0.0
        %377 = vmatprep.subr.mxu0 0.0
        %378 = vmatpush1.msra.mxu0 0.0
        %379 = vmatprep.subr.mxu0 0.0
        %380 = vmatpush1.msra.mxu0 0.0
        %381 = vmatprep.subr.mxu0 0.0
        %382 = vmatpush1.msra.mxu0 0.0
        %383 = vmatprep.subr.mxu0 0.0
        %384 = vmatpush1.msra.mxu0 0.0
        %385 = vmatprep.subr.mxu0 0.0
        %386 = vmatpush1.msra.mxu0 0.0
        %387 = vmatprep.subr.mxu0 0.0
        %388 = vmatpush1.msra.mxu0 0.0
        %389 = vmatprep.subr.mxu0 0.0
        %390 = vmatpush1.msra.mxu0 0.0
        %391 = vmatprep.subr.mxu0 0.0
        %392 = vmatpush1.msra.mxu0 0.0
        %393 = vmatprep.subr.mxu0 0.0
        %394 = vmatpush1.msra.mxu0 0.0
        %395 = vmatprep.subr.mxu0 0.0
        %396 = vmatpush1.msra.mxu0 0.0
        %397 = vmatprep.subr.mxu0 0.0
        %398 = vmatpush1.msra.mxu0 0.0
        %399 = vmatprep.subr.mxu0 0.0
        %400 = vmatpush1.msra.mxu0 0.0
        %401 = vmatprep.subr.mxu0 0.0
        %402 = vmatpush1.msra.mxu0 0.0
        %403 = vmatprep.subr.mxu0 0.0
        %404 = vmatpush1.msra.mxu0 0.0
        %405 = vmatprep.subr.mxu0 0.0
        %406 = vmatpush1.msra.mxu0 0.0
        %407 = vmatprep.subr.mxu0 0.0
        %408 = vmatpush1.msra.mxu0 0.0
        %409 = vmatprep.subr.mxu0 0.0
        %410 = vmatpush1.msra.mxu0 0.0
        %411 = vmatprep.subr.mxu0 0.0
        %412 = vmatpush1.msra.mxu0 0.0
        %413 = vmatprep.mubr.f32.mxu0 0.0
        %414 = vmatmul.mubr.f32.gmra.mrb[0].mxu0 %v344
        %v415 = vpop.f32.mrb[0].mxu0
        %v416 = vadd.f32 0.0, %v415
        %v417 = vpop.f32.mrb[0].mxu0
        %418 = vmatprep.mubr.f32.mxu0 0.0
        %419 = vmatmul.mubr.f32.gmra.mrb[0].mxu0 %v347
        %v420 = vpop.f32.mrb[0].mxu0
        %v421 = vadd.f32 0.0, %v420
        %v422 = vpop.f32.mrb[0].mxu0
        %423 = vdwg.mxu0
        %v425 = vsel %vm319, %v322, 0
        %v428 = vsel %vm319, %v323, 0
        %430 = vmatprep.subr.mxu0 0.0
        %431 = vmatpush1.msra.mxu0 %v324
        %432 = vmatprep.subr.mxu0 0.0
        %433 = vmatpush1.msra.mxu0 %v325
        %434 = vmatprep.subr.mxu0 0.0
        %435 = vmatpush1.msra.mxu0 %v326
        %436 = vmatprep.subr.mxu0 0.0
        %437 = vmatpush1.msra.mxu0 %v327
        %438 = vmatprep.subr.mxu0 0.0
        %439 = vmatpush1.msra.mxu0 %v328
        %440 = vmatprep.subr.mxu0 0.0
        %441 = vmatpush1.msra.mxu0 %v329
        %442 = vmatprep.subr.mxu0 0.0
        %443 = vmatpush1.msra.mxu0 %v330
        %444 = vmatprep.subr.mxu0 0.0
        %445 = vmatpush1.msra.mxu0 %v331
        %446 = vmatprep.subr.mxu0 0.0
        %447 = vmatpush1.msra.mxu0 0.0
        %448 = vmatprep.subr.mxu0 0.0
        %449 = vmatpush1.msra.mxu0 0.0
        %450 = vmatprep.subr.mxu0 0.0
        %451 = vmatpush1.msra.mxu0 0.0
        %452 = vmatprep.subr.mxu0 0.0
        %453 = vmatpush1.msra.mxu0 0.0
        %454 = vmatprep.subr.mxu0 0.0
        %455 = vmatpush1.msra.mxu0 0.0
        %456 = vmatprep.subr.mxu0 0.0
        %457 = vmatpush1.msra.mxu0 0.0
        %458 = vmatprep.subr.mxu0 0.0
        %459 = vmatpush1.msra.mxu0 0.0
        %460 = vmatprep.subr.mxu0 0.0
        %461 = vmatpush1.msra.mxu0 0.0
        %462 = vmatprep.subr.mxu0 0.0
        %463 = vmatpush1.msra.mxu0 0.0
        %464 = vmatprep.subr.mxu0 0.0
        %465 = vmatpush1.msra.mxu0 0.0
        %466 = vmatprep.subr.mxu0 0.0
        %467 = vmatpush1.msra.mxu0 0.0
        %468 = vmatprep.subr.mxu0 0.0
        %469 = vmatpush1.msra.mxu0 0.0
        %470 = vmatprep.subr.mxu0 0.0
        %471 = vmatpush1.msra.mxu0 0.0
        %472 = vmatprep.subr.mxu0 0.0
        %473 = vmatpush1.msra.mxu0 0.0
        %474 = vmatprep.subr.mxu0 0.0
        %475 = vmatpush1.msra.mxu0 0.0
        %476 = vmatprep.subr.mxu0 0.0
        %477 = vmatpush1.msra.mxu0 0.0
        %478 = vmatprep.subr.mxu0 0.0
        %479 = vmatpush1.msra.mxu0 0.0
        %480 = vmatprep.subr.mxu0 0.0
        %481 = vmatpush1.msra.mxu0 0.0
        %482 = vmatprep.subr.mxu0 0.0
        %483 = vmatpush1.msra.mxu0 0.0
        %484 = vmatprep.subr.mxu0 0.0
        %485 = vmatpush1.msra.mxu0 0.0
        %486 = vmatprep.subr.mxu0 0.0
        %487 = vmatpush1.msra.mxu0 0.0
        %488 = vmatprep.subr.mxu0 0.0
        %489 = vmatpush1.msra.mxu0 0.0
        %490 = vmatprep.subr.mxu0 0.0
        %491 = vmatpush1.msra.mxu0 0.0
        %492 = vmatprep.subr.mxu0 0.0
        %493 = vmatpush1.msra.mxu0 0.0
        %494 = vmatprep.mubr.f32.mxu0 0.0
        %495 = vmatmul.mubr.f32.gmra.mrb[0].mxu0 %v425
        %v496 = vpop.f32.mrb[0].mxu0
        %v497 = vadd.f32 %v416, %v496
        %v498 = vpop.f32.mrb[0].mxu0
        %499 = vmatprep.mubr.f32.mxu0 0.0
        %500 = vmatmul.mubr.f32.gmra.mrb[0].mxu0 %v428
        %v501 = vpop.f32.mrb[0].mxu0
        %v502 = vadd.f32 %v421, %v501
        %v503 = vpop.f32.mrb[0].mxu0
        %504 = vdwg.mxu0
        %v505 = vld [vmem:[#allocation2 + $0x2] sm:$0xff]
        %v506 = vld [vmem:[#allocation2 + $0xa] sm:$0xff]
        %s507 = scalar_lea.vmem [#allocation7], 128
        %v508 = vld [vmem:[%s507] sm:$0xff]
        %v509 = vld [vmem:[%s507 + $0x8] sm:$0xff]
        %v510 = vld [vmem:[%s507 + $0x10] sm:$0xff]
        %v511 = vld [vmem:[%s507 + $0x18] sm:$0xff]
        %v512 = vld [vmem:[%s507 + $0x20] sm:$0xff]
        %v513 = vld [vmem:[%s507 + $0x28] sm:$0xff]
        %v514 = vld [vmem:[%s507 + $0x30] sm:$0xff]
        %v515 = vld [vmem:[%s507 + $0x38] sm:$0xff]
        %v517 = vsel %vm319, %v505, 0
        %v520 = vsel %vm319, %v506, 0
        %522 = vmatprep.subr.mxu0 0.0
        %523 = vmatpush1.msra.mxu0 %v508
        %524 = vmatprep.subr.mxu0 0.0
        %525 = vmatpush1.msra.mxu0 %v509
        %526 = vmatprep.subr.mxu0 0.0
        %527 = vmatpush1.msra.mxu0 %v510
        %528 = vmatprep.subr.mxu0 0.0
        %529 = vmatpush1.msra.mxu0 %v511
        %530 = vmatprep.subr.mxu0 0.0
        %531 = vmatpush1.msra.mxu0 %v512
        %532 = vmatprep.subr.mxu0 0.0
        %533 = vmatpush1.msra.mxu0 %v513
        %534 = vmatprep.subr.mxu0 0.0
        %535 = vmatpush1.msra.mxu0 %v514
        %536 = vmatprep.subr.mxu0 0.0
        %537 = vmatpush1.msra.mxu0 %v515
        %538 = vmatprep.subr.mxu0 0.0
        %539 = vmatpush1.msra.mxu0 0.0
        %540 = vmatprep.subr.mxu0 0.0
        %541 = vmatpush1.msra.mxu0 0.0
        %542 = vmatprep.subr.mxu0 0.0
        %543 = vmatpush1.msra.mxu0 0.0
        %544 = vmatprep.subr.mxu0 0.0
        %545 = vmatpush1.msra.mxu0 0.0
        %546 = vmatprep.subr.mxu0 0.0
        %547 = vmatpush1.msra.mxu0 0.0
        %548 = vmatprep.subr.mxu0 0.0
        %549 = vmatpush1.msra.mxu0 0.0
        %550 = vmatprep.subr.mxu0 0.0
        %551 = vmatpush1.msra.mxu0 0.0
        %552 = vmatprep.subr.mxu0 0.0
        %553 = vmatpush1.msra.mxu0 0.0
        %554 = vmatprep.subr.mxu0 0.0
        %555 = vmatpush1.msra.mxu0 0.0
        %556 = vmatprep.subr.mxu0 0.0
        %557 = vmatpush1.msra.mxu0 0.0
        %558 = vmatprep.subr.mxu0 0.0
        %559 = vmatpush1.msra.mxu0 0.0
        %560 = vmatprep.subr.mxu0 0.0
        %561 = vmatpush1.msra.mxu0 0.0
        %562 = vmatprep.subr.mxu0 0.0
        %563 = vmatpush1.msra.mxu0 0.0
        %564 = vmatprep.subr.mxu0 0.0
        %565 = vmatpush1.msra.mxu0 0.0
        %566 = vmatprep.subr.mxu0 0.0
        %567 = vmatpush1.msra.mxu0 0.0
        %568 = vmatprep.subr.mxu0 0.0
        %569 = vmatpush1.msra.mxu0 0.0
        %570 = vmatprep.subr.mxu0 0.0
        %571 = vmatpush1.msra.mxu0 0.0
        %572 = vmatprep.subr.mxu0 0.0
        %573 = vmatpush1.msra.mxu0 0.0
        %574 = vmatprep.subr.mxu0 0.0
        %575 = vmatpush1.msra.mxu0 0.0
        %576 = vmatprep.subr.mxu0 0.0
        %577 = vmatpush1.msra.mxu0 0.0
        %578 = vmatprep.subr.mxu0 0.0
        %579 = vmatpush1.msra.mxu0 0.0
        %580 = vmatprep.subr.mxu0 0.0
        %581 = vmatpush1.msra.mxu0 0.0
        %582 = vmatprep.subr.mxu0 0.0
        %583 = vmatpush1.msra.mxu0 0.0
        %584 = vmatprep.subr.mxu0 0.0
        %585 = vmatpush1.msra.mxu0 0.0
        %586 = vmatprep.mubr.f32.mxu0 0.0
        %587 = vmatmul.mubr.f32.gmra.mrb[0].mxu0 %v517
        %v588 = vpop.f32.mrb[0].mxu0
        %v589 = vadd.f32 0.0, %v588
        %v590 = vpop.f32.mrb[0].mxu0
        %591 = vmatprep.mubr.f32.mxu0 0.0
        %592 = vmatmul.mubr.f32.gmra.mrb[0].mxu0 %v520
        %v593 = vpop.f32.mrb[0].mxu0
        %v594 = vadd.f32 0.0, %v593
        %v595 = vpop.f32.mrb[0].mxu0
        %596 = vdwg.mxu0
        %v597 = vadd.f32 %v497, %v589
        %v598 = vadd.f32 %v502, %v594
        %v599 = vld [vmem:[%s4] sm:$0x1]
        %v601 = vlaneseq
        %v602 = vshrl.u32 %v601, 7
        %v603 = vsub.s32 0, %v602
        %v604 = vrot.slane %v599, %v603
        %v606 = vadd.f32 %v597, %v604
        %v607 = vadd.f32 %v598, %v604
        %v608 = vmul.f32 %v606, 0.01
        %v609 = vmul.f32 %v607, 0.01
        %v610 = vmax.f32 %v606, %v608
        %v611 = vmax.f32 %v607, %v609
        %612 = vst [vmem:[#allocation3] sm:$0x1] 0.0
        %613 = vst [vmem:[#allocation3 + $0x11] sm:$0x1] 0.0
        %614 = vst [vmem:[#allocation3 + $0x1] sm:$0xff] %v610
        %615 = vst [vmem:[#allocation3 + $0x9] sm:$0xff] %v611
        %v616 = vld [vmem:[#allocation10] sm:$0xff]
        %v617 = vld [vmem:[#allocation10 + $0x8] sm:$0xff]
        %v618 = vld [vmem:[#allocation10 + $0x10] sm:$0xff]
        %v619 = vld [vmem:[#allocation10 + $0x18] sm:$0xff]
        %v620 = vld [vmem:[#allocation10 + $0x20] sm:$0xff]
        %v621 = vld [vmem:[#allocation10 + $0x28] sm:$0xff]
        %v622 = vld [vmem:[#allocation10 + $0x30] sm:$0xff]
        %v623 = vld [vmem:[#allocation10 + $0x38] sm:$0xff]
        %v624 = vld [vmem:[%s5] sm:$0x1]
        %v626 = vlaneseq
        %v627 = vshrl.u32 %v626, 7
        %v628 = vsub.s32 0, %v627
        %v629 = vrot.slane %v624, %v628
        %v632 = vsel %vm319, %v314, 0
        %v635 = vsel %vm319, %v315, 0
        %637 = vmatprep.subr.mxu0 0.0
        %638 = vmatpush1.msra.mxu0 %v616
        %639 = vmatprep.subr.mxu0 0.0
        %640 = vmatpush1.msra.mxu0 %v617
        %641 = vmatprep.subr.mxu0 0.0
        %642 = vmatpush1.msra.mxu0 %v618
        %643 = vmatprep.subr.mxu0 0.0
        %644 = vmatpush1.msra.mxu0 %v619
        %645 = vmatprep.subr.mxu0 0.0
        %646 = vmatpush1.msra.mxu0 %v620
        %647 = vmatprep.subr.mxu0 0.0
        %648 = vmatpush1.msra.mxu0 %v621
        %649 = vmatprep.subr.mxu0 0.0
        %650 = vmatpush1.msra.mxu0 %v622
        %651 = vmatprep.subr.mxu0 0.0
        %652 = vmatpush1.msra.mxu0 %v623
        %653 = vmatprep.subr.mxu0 0.0
        %654 = vmatpush1.msra.mxu0 0.0
        %655 = vmatprep.subr.mxu0 0.0
        %656 = vmatpush1.msra.mxu0 0.0
        %657 = vmatprep.subr.mxu0 0.0
        %658 = vmatpush1.msra.mxu0 0.0
        %659 = vmatprep.subr.mxu0 0.0
        %660 = vmatpush1.msra.mxu0 0.0
        %661 = vmatprep.subr.mxu0 0.0
        %662 = vmatpush1.msra.mxu0 0.0
        %663 = vmatprep.subr.mxu0 0.0
        %664 = vmatpush1.msra.mxu0 0.0
        %665 = vmatprep.subr.mxu0 0.0
        %666 = vmatpush1.msra.mxu0 0.0
        %667 = vmatprep.subr.mxu0 0.0
        %668 = vmatpush1.msra.mxu0 0.0
        %669 = vmatprep.subr.mxu0 0.0
        %670 = vmatpush1.msra.mxu0 0.0
        %671 = vmatprep.subr.mxu0 0.0
        %672 = vmatpush1.msra.mxu0 0.0
        %673 = vmatprep.subr.mxu0 0.0
        %674 = vmatpush1.msra.mxu0 0.0
        %675 = vmatprep.subr.mxu0 0.0
        %676 = vmatpush1.msra.mxu0 0.0
        %677 = vmatprep.subr.mxu0 0.0
        %678 = vmatpush1.msra.mxu0 0.0
        %679 = vmatprep.subr.mxu0 0.0
        %680 = vmatpush1.msra.mxu0 0.0
        %681 = vmatprep.subr.mxu0 0.0
        %682 = vmatpush1.msra.mxu0 0.0
        %683 = vmatprep.subr.mxu0 0.0
        %684 = vmatpush1.msra.mxu0 0.0
        %685 = vmatprep.subr.mxu0 0.0
        %686 = vmatpush1.msra.mxu0 0.0
        %687 = vmatprep.subr.mxu0 0.0
        %688 = vmatpush1.msra.mxu0 0.0
        %689 = vmatprep.subr.mxu0 0.0
        %690 = vmatpush1.msra.mxu0 0.0
        %691 = vmatprep.subr.mxu0 0.0
        %692 = vmatpush1.msra.mxu0 0.0
        %693 = vmatprep.subr.mxu0 0.0
        %694 = vmatpush1.msra.mxu0 0.0
        %695 = vmatprep.subr.mxu0 0.0
        %696 = vmatpush1.msra.mxu0 0.0
        %697 = vmatprep.subr.mxu0 0.0
        %698 = vmatpush1.msra.mxu0 0.0
        %699 = vmatprep.subr.mxu0 0.0
        %700 = vmatpush1.msra.mxu0 0.0
        %701 = vmatprep.mubr.f32.mxu0 0.0
        %702 = vmatmul.mubr.f32.gmra.mrb[0].mxu0 %v632
        %v703 = vpop.f32.mrb[0].mxu0
        %v704 = vadd.f32 %v629, %v703
        %v705 = vpop.f32.mrb[0].mxu0
        %706 = vmatprep.mubr.f32.mxu0 0.0
        %707 = vmatmul.mubr.f32.gmra.mrb[0].mxu0 %v635
        %v708 = vpop.f32.mrb[0].mxu0
        %v709 = vadd.f32 %v629, %v708
        %v710 = vpop.f32.mrb[0].mxu0
        %711 = vdwg.mxu0
        %v712 = vld [vmem:[#allocation3] sm:$0xff]
        %v713 = vld [vmem:[#allocation3 + $0x8] sm:$0xff]
        %v714 = vld [vmem:[#allocation9] sm:$0xff]
        %v715 = vld [vmem:[#allocation9 + $0x8] sm:$0xff]
        %v716 = vld [vmem:[#allocation9 + $0x10] sm:$0xff]
        %v717 = vld [vmem:[#allocation9 + $0x18] sm:$0xff]
        %v718 = vld [vmem:[#allocation9 + $0x20] sm:$0xff]
        %v719 = vld [vmem:[#allocation9 + $0x28] sm:$0xff]
        %v720 = vld [vmem:[#allocation9 + $0x30] sm:$0xff]
        %v721 = vld [vmem:[#allocation9 + $0x38] sm:$0xff]
        %v722 = vld [vmem:[#allocation9 + $0x40] sm:$0xff]
        %v723 = vld [vmem:[#allocation9 + $0x48] sm:$0xff]
        %v724 = vld [vmem:[#allocation9 + $0x50] sm:$0xff]
        %v725 = vld [vmem:[#allocation9 + $0x58] sm:$0xff]
        %v726 = vld [vmem:[#allocation9 + $0x60] sm:$0xff]
        %v727 = vld [vmem:[#allocation9 + $0x68] sm:$0xff]
        %v728 = vld [vmem:[#allocation9 + $0x70] sm:$0xff]
        %v729 = vld [vmem:[#allocation9 + $0x78] sm:$0xff]
        %730 = vmatprep.subr.mxu0 0.0
        %731 = vmatpush1.msra.mxu0 %v714
        %732 = vmatprep.subr.mxu0 0.0
        %733 = vmatpush1.msra.mxu0 %v715
        %734 = vmatprep.subr.mxu0 0.0
        %735 = vmatpush1.msra.mxu0 %v716
        %736 = vmatprep.subr.mxu0 0.0
        %737 = vmatpush1.msra.mxu0 %v717
        %738 = vmatprep.subr.mxu0 0.0
        %739 = vmatpush1.msra.mxu0 %v718
        %740 = vmatprep.subr.mxu0 0.0
        %741 = vmatpush1.msra.mxu0 %v719
        %742 = vmatprep.subr.mxu0 0.0
        %743 = vmatpush1.msra.mxu0 %v720
        %744 = vmatprep.subr.mxu0 0.0
        %745 = vmatpush1.msra.mxu0 %v721
        %746 = vmatprep.subr.mxu0 0.0
        %747 = vmatpush1.msra.mxu0 %v722
        %748 = vmatprep.subr.mxu0 0.0
        %749 = vmatpush1.msra.mxu0 %v723
        %750 = vmatprep.subr.mxu0 0.0
        %751 = vmatpush1.msra.mxu0 %v724
        %752 = vmatprep.subr.mxu0 0.0
        %753 = vmatpush1.msra.mxu0 %v725
        %754 = vmatprep.subr.mxu0 0.0
        %755 = vmatpush1.msra.mxu0 %v726
        %756 = vmatprep.subr.mxu0 0.0
        %757 = vmatpush1.msra.mxu0 %v727
        %758 = vmatprep.subr.mxu0 0.0
        %759 = vmatpush1.msra.mxu0 %v728
        %760 = vmatprep.subr.mxu0 0.0
        %761 = vmatpush1.msra.mxu0 %v729
        %762 = vmatprep.subr.mxu0 0.0
        %763 = vmatpush1.msra.mxu0 0.0
        %764 = vmatprep.subr.mxu0 0.0
        %765 = vmatpush1.msra.mxu0 0.0
        %766 = vmatprep.subr.mxu0 0.0
        %767 = vmatpush1.msra.mxu0 0.0
        %768 = vmatprep.subr.mxu0 0.0
        %769 = vmatpush1.msra.mxu0 0.0
        %770 = vmatprep.subr.mxu0 0.0
        %771 = vmatpush1.msra.mxu0 0.0
        %772 = vmatprep.subr.mxu0 0.0
        %773 = vmatpush1.msra.mxu0 0.0
        %774 = vmatprep.subr.mxu0 0.0
        %775 = vmatpush1.msra.mxu0 0.0
        %776 = vmatprep.subr.mxu0 0.0
        %777 = vmatpush1.msra.mxu0 0.0
        %778 = vmatprep.subr.mxu0 0.0
        %779 = vmatpush1.msra.mxu0 0.0
        %780 = vmatprep.subr.mxu0 0.0
        %781 = vmatpush1.msra.mxu0 0.0
        %782 = vmatprep.subr.mxu0 0.0
        %783 = vmatpush1.msra.mxu0 0.0
        %784 = vmatprep.subr.mxu0 0.0
        %785 = vmatpush1.msra.mxu0 0.0
        %786 = vmatprep.subr.mxu0 0.0
        %787 = vmatpush1.msra.mxu0 0.0
        %788 = vmatprep.subr.mxu0 0.0
        %789 = vmatpush1.msra.mxu0 0.0
        %790 = vmatprep.subr.mxu0 0.0
        %791 = vmatpush1.msra.mxu0 0.0
        %792 = vmatprep.subr.mxu0 0.0
        %793 = vmatpush1.msra.mxu0 0.0
        %794 = vmatprep.mubr.f32.mxu0 0.0
        %795 = vmatmul.mubr.f32.gmra.mrb[0].mxu0 %v712
        %v796 = vpop.f32.mrb[0].mxu0
        %v797 = vadd.f32 0.0, %v796
        %v798 = vpop.f32.mrb[0].mxu0
        %799 = vmatprep.mubr.f32.mxu0 0.0
        %800 = vmatmul.mubr.f32.gmra.mrb[0].mxu0 %v713
        %v801 = vpop.f32.mrb[0].mxu0
        %v802 = vadd.f32 0.0, %v801
        %v803 = vpop.f32.mrb[0].mxu0
        %804 = vdwg.mxu0
        %v805 = vadd.f32 %v704, %v797
        %v806 = vadd.f32 %v709, %v802
        %v807 = vld [vmem:[#allocation3 + $0x1] sm:$0xff]
        %v808 = vld [vmem:[#allocation3 + $0x9] sm:$0xff]
        %s809 = scalar_lea.vmem [#allocation9], 128
        %v810 = vld [vmem:[%s809] sm:$0xff]
        %v811 = vld [vmem:[%s809 + $0x8] sm:$0xff]
        %v812 = vld [vmem:[%s809 + $0x10] sm:$0xff]
        %v813 = vld [vmem:[%s809 + $0x18] sm:$0xff]
        %v814 = vld [vmem:[%s809 + $0x20] sm:$0xff]
        %v815 = vld [vmem:[%s809 + $0x28] sm:$0xff]
        %v816 = vld [vmem:[%s809 + $0x30] sm:$0xff]
        %v817 = vld [vmem:[%s809 + $0x38] sm:$0xff]
        %v818 = vld [vmem:[%s809 + $0x40] sm:$0xff]
        %v819 = vld [vmem:[%s809 + $0x48] sm:$0xff]
        %v820 = vld [vmem:[%s809 + $0x50] sm:$0xff]
        %v821 = vld [vmem:[%s809 + $0x58] sm:$0xff]
        %v822 = vld [vmem:[%s809 + $0x60] sm:$0xff]
        %v823 = vld [vmem:[%s809 + $0x68] sm:$0xff]
        %v824 = vld [vmem:[%s809 + $0x70] sm:$0xff]
        %v825 = vld [vmem:[%s809 + $0x78] sm:$0xff]
        %826 = vmatprep.subr.mxu0 0.0
        %827 = vmatpush1.msra.mxu0 %v810
        %828 = vmatprep.subr.mxu0 0.0
        %829 = vmatpush1.msra.mxu0 %v811
        %830 = vmatprep.subr.mxu0 0.0
        %831 = vmatpush1.msra.mxu0 %v812
        %832 = vmatprep.subr.mxu0 0.0
        %833 = vmatpush1.msra.mxu0 %v813
        %834 = vmatprep.subr.mxu0 0.0
        %835 = vmatpush1.msra.mxu0 %v814
        %836 = vmatprep.subr.mxu0 0.0
        %837 = vmatpush1.msra.mxu0 %v815
        %838 = vmatprep.subr.mxu0 0.0
        %839 = vmatpush1.msra.mxu0 %v816
        %840 = vmatprep.subr.mxu0 0.0
        %841 = vmatpush1.msra.mxu0 %v817
        %842 = vmatprep.subr.mxu0 0.0
        %843 = vmatpush1.msra.mxu0 %v818
        %844 = vmatprep.subr.mxu0 0.0
        %845 = vmatpush1.msra.mxu0 %v819
        %846 = vmatprep.subr.mxu0 0.0
        %847 = vmatpush1.msra.mxu0 %v820
        %848 = vmatprep.subr.mxu0 0.0
        %849 = vmatpush1.msra.mxu0 %v821
        %850 = vmatprep.subr.mxu0 0.0
        %851 = vmatpush1.msra.mxu0 %v822
        %852 = vmatprep.subr.mxu0 0.0
        %853 = vmatpush1.msra.mxu0 %v823
        %854 = vmatprep.subr.mxu0 0.0
        %855 = vmatpush1.msra.mxu0 %v824
        %856 = vmatprep.subr.mxu0 0.0
        %857 = vmatpush1.msra.mxu0 %v825
        %858 = vmatprep.subr.mxu0 0.0
        %859 = vmatpush1.msra.mxu0 0.0
        %860 = vmatprep.subr.mxu0 0.0
        %861 = vmatpush1.msra.mxu0 0.0
        %862 = vmatprep.subr.mxu0 0.0
        %863 = vmatpush1.msra.mxu0 0.0
        %864 = vmatprep.subr.mxu0 0.0
        %865 = vmatpush1.msra.mxu0 0.0
        %866 = vmatprep.subr.mxu0 0.0
        %867 = vmatpush1.msra.mxu0 0.0
        %868 = vmatprep.subr.mxu0 0.0
        %869 = vmatpush1.msra.mxu0 0.0
        %870 = vmatprep.subr.mxu0 0.0
        %871 = vmatpush1.msra.mxu0 0.0
        %872 = vmatprep.subr.mxu0 0.0
        %873 = vmatpush1.msra.mxu0 0.0
        %874 = vmatprep.subr.mxu0 0.0
        %875 = vmatpush1.msra.mxu0 0.0
        %876 = vmatprep.subr.mxu0 0.0
        %877 = vmatpush1.msra.mxu0 0.0
        %878 = vmatprep.subr.mxu0 0.0
        %879 = vmatpush1.msra.mxu0 0.0
        %880 = vmatprep.subr.mxu0 0.0
        %881 = vmatpush1.msra.mxu0 0.0
        %882 = vmatprep.subr.mxu0 0.0
        %883 = vmatpush1.msra.mxu0 0.0
        %884 = vmatprep.subr.mxu0 0.0
        %885 = vmatpush1.msra.mxu0 0.0
        %886 = vmatprep.subr.mxu0 0.0
        %887 = vmatpush1.msra.mxu0 0.0
        %888 = vmatprep.subr.mxu0 0.0
        %889 = vmatpush1.msra.mxu0 0.0
        %890 = vmatprep.mubr.f32.mxu0 0.0
        %891 = vmatmul.mubr.f32.gmra.mrb[0].mxu0 %v807
        %v892 = vpop.f32.mrb[0].mxu0
        %v893 = vadd.f32 0.0, %v892
        %v894 = vpop.f32.mrb[0].mxu0
        %895 = vmatprep.mubr.f32.mxu0 0.0
        %896 = vmatmul.mubr.f32.gmra.mrb[0].mxu0 %v808
        %v897 = vpop.f32.mrb[0].mxu0
        %v898 = vadd.f32 0.0, %v897
        %v899 = vpop.f32.mrb[0].mxu0
        %900 = vdwg.mxu0
        %v901 = vadd.f32 %v805, %v893
        %v902 = vadd.f32 %v806, %v898
        %v903 = vld [vmem:[#allocation3 + $0x2] sm:$0xff]
        %v904 = vld [vmem:[#allocation3 + $0xa] sm:$0xff]
        %s905 = scalar_lea.vmem [#allocation9], 256
        %v906 = vld [vmem:[%s905] sm:$0xff]
        %v907 = vld [vmem:[%s905 + $0x8] sm:$0xff]
        %v908 = vld [vmem:[%s905 + $0x10] sm:$0xff]
        %v909 = vld [vmem:[%s905 + $0x18] sm:$0xff]
        %v910 = vld [vmem:[%s905 + $0x20] sm:$0xff]
        %v911 = vld [vmem:[%s905 + $0x28] sm:$0xff]
        %v912 = vld [vmem:[%s905 + $0x30] sm:$0xff]
        %v913 = vld [vmem:[%s905 + $0x38] sm:$0xff]
        %v914 = vld [vmem:[%s905 + $0x40] sm:$0xff]
        %v915 = vld [vmem:[%s905 + $0x48] sm:$0xff]
        %v916 = vld [vmem:[%s905 + $0x50] sm:$0xff]
        %v917 = vld [vmem:[%s905 + $0x58] sm:$0xff]
        %v918 = vld [vmem:[%s905 + $0x60] sm:$0xff]
        %v919 = vld [vmem:[%s905 + $0x68] sm:$0xff]
        %v920 = vld [vmem:[%s905 + $0x70] sm:$0xff]
        %v921 = vld [vmem:[%s905 + $0x78] sm:$0xff]
        %922 = vmatprep.subr.mxu0 0.0
        %923 = vmatpush1.msra.mxu0 %v906
        %924 = vmatprep.subr.mxu0 0.0
        %925 = vmatpush1.msra.mxu0 %v907
        %926 = vmatprep.subr.mxu0 0.0
        %927 = vmatpush1.msra.mxu0 %v908
        %928 = vmatprep.subr.mxu0 0.0
        %929 = vmatpush1.msra.mxu0 %v909
        %930 = vmatprep.subr.mxu0 0.0
        %931 = vmatpush1.msra.mxu0 %v910
        %932 = vmatprep.subr.mxu0 0.0
        %933 = vmatpush1.msra.mxu0 %v911
        %934 = vmatprep.subr.mxu0 0.0
        %935 = vmatpush1.msra.mxu0 %v912
        %936 = vmatprep.subr.mxu0 0.0
        %937 = vmatpush1.msra.mxu0 %v913
        %938 = vmatprep.subr.mxu0 0.0
        %939 = vmatpush1.msra.mxu0 %v914
        %940 = vmatprep.subr.mxu0 0.0
        %941 = vmatpush1.msra.mxu0 %v915
        %942 = vmatprep.subr.mxu0 0.0
        %943 = vmatpush1.msra.mxu0 %v916
        %944 = vmatprep.subr.mxu0 0.0
        %945 = vmatpush1.msra.mxu0 %v917
        %946 = vmatprep.subr.mxu0 0.0
        %947 = vmatpush1.msra.mxu0 %v918
        %948 = vmatprep.subr.mxu0 0.0
        %949 = vmatpush1.msra.mxu0 %v919
        %950 = vmatprep.subr.mxu0 0.0
        %951 = vmatpush1.msra.mxu0 %v920
        %952 = vmatprep.subr.mxu0 0.0
        %953 = vmatpush1.msra.mxu0 %v921
        %954 = vmatprep.subr.mxu0 0.0
        %955 = vmatpush1.msra.mxu0 0.0
        %956 = vmatprep.subr.mxu0 0.0
        %957 = vmatpush1.msra.mxu0 0.0
        %958 = vmatprep.subr.mxu0 0.0
        %959 = vmatpush1.msra.mxu0 0.0
        %960 = vmatprep.subr.mxu0 0.0
        %961 = vmatpush1.msra.mxu0 0.0
        %962 = vmatprep.subr.mxu0 0.0
        %963 = vmatpush1.msra.mxu0 0.0
        %964 = vmatprep.subr.mxu0 0.0
        %965 = vmatpush1.msra.mxu0 0.0
        %966 = vmatprep.subr.mxu0 0.0
        %967 = vmatpush1.msra.mxu0 0.0
        %968 = vmatprep.subr.mxu0 0.0
        %969 = vmatpush1.msra.mxu0 0.0
        %970 = vmatprep.subr.mxu0 0.0
        %971 = vmatpush1.msra.mxu0 0.0
        %972 = vmatprep.subr.mxu0 0.0
        %973 = vmatpush1.msra.mxu0 0.0
        %974 = vmatprep.subr.mxu0 0.0
        %975 = vmatpush1.msra.mxu0 0.0
        %976 = vmatprep.subr.mxu0 0.0
        %977 = vmatpush1.msra.mxu0 0.0
        %978 = vmatprep.subr.mxu0 0.0
        %979 = vmatpush1.msra.mxu0 0.0
        %980 = vmatprep.subr.mxu0 0.0
        %981 = vmatpush1.msra.mxu0 0.0
        %982 = vmatprep.subr.mxu0 0.0
        %983 = vmatpush1.msra.mxu0 0.0
        %984 = vmatprep.subr.mxu0 0.0
        %985 = vmatpush1.msra.mxu0 0.0
        %986 = vmatprep.mubr.f32.mxu0 0.0
        %987 = vmatmul.mubr.f32.gmra.mrb[0].mxu0 %v903
        %v988 = vpop.f32.mrb[0].mxu0
        %v989 = vadd.f32 0.0, %v988
        %v990 = vpop.f32.mrb[0].mxu0
        %991 = vmatprep.mubr.f32.mxu0 0.0
        %992 = vmatmul.mubr.f32.gmra.mrb[0].mxu0 %v904
        %v993 = vpop.f32.mrb[0].mxu0
        %v994 = vadd.f32 0.0, %v993
        %v995 = vpop.f32.mrb[0].mxu0
        %996 = vdwg.mxu0
        %v997 = vadd.f32 %v901, %v989
        %v998 = vadd.f32 %v902, %v994
        %999 = vst [vmem:[%s313] sm:$0xff] %v997
        %1000 = vst [vmem:[%s313 + $0x8] sm:$0xff] %v998
        %s1001 = sand.u32 %s164, 1
        %s1002 = scalar_lea.sflag [#allocation6], %s1001
        %s1003 = sand.u32 %s164, 1
        %s1004 = smul.addr %s1003, 16
        %s1005 = scalar_lea.vmem [#allocation12], %s1004
        // Predicated region
        $region61: #{tpu_custom_call.1} parent=43 // pred_check
          %p1006 = pneg %p174
        $region62: #{tpu_custom_call.1} parent=43 // pred_check_branch
          %1008 = sbr.rel (%p1006) target = $region64
        $region63: #{tpu_custom_call.1} parent=43 // pred_region
          %s1010 = ssub.s32 256, 256
          %1011 = vsyncadd %s1002, %s1010
          %s1012 = smul.addr %s25, 2
          %s1013 = smul.addr %s1012, 128
          %s1014 = scalar_lea.hbm %s6, %s1013
          %s1015 = sshll.u32 %s1005, 4
          %s1016 = int_to_ptr.vmem [resolvable:$true] %s1015
          %1021 = dma.vmem_to_hbm [thread:$0]  %s1016, 256, %s1014, %s1002, 128, 128, 8
        $region64: #{tpu_custom_call.1} parent=43 // pred_fallthru
          _
      $region44: #{tpu_custom_call.1} parent=5 // pred_fallthru
        _
      %p1022 = scmp.le.s32.totalorder 2, %s20
      // Predicated region
      $region65: #{tpu_custom_call.1} parent=5 // pred_check
        %p1023 = pneg %p1022
      $region66: #{tpu_custom_call.1} parent=5 // pred_check_branch
        %1025 = sbr.rel (%p1023) target = $region68
      $region67: #{tpu_custom_call.1} parent=5 // pred_region
        %s1026 = ssub.s32 %s20, 2
        // Predicated region
        $region69: #{tpu_custom_call.1} parent=67 // pred_check
          %p1027 = pneg %p180
        $region70: #{tpu_custom_call.1} parent=67 // pred_check_branch
          %1029 = sbr.rel (%p1027) target = $region72
        $region71: #{tpu_custom_call.1} parent=67 // pred_region
          %s1030 = sand.u32 %s165, 1
          %s1031 = scalar_lea.sflag [#allocation6], %s1030
          %s1032 = sand.u32 %s165, 1
          %s1033 = smul.addr %s1032, 16
          %s1034 = scalar_lea.vmem [#allocation12], %s1033
          %1035 = dma.done %s1031, 256
        $region72: #{tpu_custom_call.1} parent=67 // pred_fallthru
          _
      $region68: #{tpu_custom_call.1} parent=5 // pred_fallthru
        _
    $region6: #{tpu_custom_call.1} parent=1 // loop_footer
      %s24 = sadd.s32 1, %s20
    $region7: #{tpu_custom_call.1} parent=1 // loop_footer_branch
      %19 = sbr.rel target = $region3
    $region8: #{tpu_custom_call.1} parent=1 // loop_exit
      _
    %1036 = vsyncpa [#allocation5], 1
    %s1037 = scalar_lea.sflag [#allocation5], 1
    %1038 = vsyncpa %s1037, 1
    %1039 = vsyncpa [#allocation8], 1
    %1040 = vsyncpa [#allocation11], 1
    %1041 = vsyncpa [#allocation6], 1
    %s1042 = scalar_lea.sflag [#allocation6], 1
    %1043 = vsyncpa %s1042, 1

</llo_original>
